<compile_context>
chip_gen: v7x
topology: tpu7x:2x2x1
jax: 0.10.0
libtpu: 0.0.40
codegen_flags: <defaults>
</compile_context>

<pallas_src>
import jax
import jax.numpy as jnp
from jax.experimental import pallas as pl
from jax.experimental.pallas import tpu as pltpu


def _round_up(n, m):
    return ((n + m - 1) // m) * m


# ----------------------------- Pallas kernel ------------------------------

def _discriminator_kernel(x_ref,
                          w1_ref, b1_ref,
                          w2_ref, b2_ref,
                          w3_ref, b3_ref,
                          w4_ref, b4_ref,
                          w5_ref, b5_ref,
                          o_ref):
    """Fused MLP: 4 Linear+ReLU on the MXU, final 64->1 layer as a VPU/XLU
    multiply-reduce, sigmoid epilogue.  Accumulation / elementwise in f32."""
    cdt = w1_ref.dtype  # MXU operand dtype (bf16 by default, f32 optional)

    h = jnp.maximum(
        jnp.dot(x_ref[...], w1_ref[...], preferred_element_type=jnp.float32)
        + b1_ref[...], 0.0)
    h = jnp.maximum(
        jnp.dot(h.astype(cdt), w2_ref[...], preferred_element_type=jnp.float32)
        + b2_ref[...], 0.0)
    h = jnp.maximum(
        jnp.dot(h.astype(cdt), w3_ref[...], preferred_element_type=jnp.float32)
        + b3_ref[...], 0.0)
    h = jnp.maximum(
        jnp.dot(h.astype(cdt), w4_ref[...], preferred_element_type=jnp.float32)
        + b4_ref[...], 0.0)

    # Final Linear(64->1) (weights zero-padded to 128 lanes): VPU elementwise
    # multiply with the broadcast weight row + XLU cross-lane reduce.  Avoids
    # pushing an N=1 column through the MXU / result FIFO.
    z = jnp.sum(h * w5_ref[...], axis=-1, keepdims=True) + b5_ref[...]

    # Sigmoid epilogue in f32; reciprocal routed to the EUP.
    o_ref[...] = pl.reciprocal(1.0 + jnp.exp(-z), approx=False).astype(o_ref.dtype)


# --------------------------- One-time param prep ----------------------------

def preprocess_params(params, *, use_bf16=True):
    """Pad / cast the weights ONCE.  The result is reused across forward calls
    so no per-step pad/convert XLA ops run inside the training loop."""
    (w1, b1), (w2, b2), (w3, b3), (w4, b4), (w5, b5) = params
    cdt = jnp.bfloat16 if use_bf16 else jnp.float32

    D = w1.shape[0]
    D_pad = _round_up(D, 8)                 # sublane-friendly; no lane padding
    H4 = w4.shape[1]                        # 64
    H4_pad = _round_up(max(H4, 128), 128)   # 128 (lane-aligned for the reduce)

    return dict(
        compute_dtype=cdt,
        D=D,
        D_pad=D_pad,
        # MXU operands in the compute dtype.
        w1=jnp.pad(w1, ((0, D_pad - D), (0, 0))).astype(cdt),
        w2=w2.astype(cdt),
        w3=w3.astype(cdt),
        w4=jnp.pad(w4, ((0, 0), (0, H4_pad - H4))).astype(cdt),
        # Biases, final weight row and all elementwise math stay f32.
        b1=b1.astype(jnp.float32),
        b2=b2.astype(jnp.float32),
        b3=b3.astype(jnp.float32),
        b4=jnp.pad(b4, ((0, 0), (0, H4_pad - H4))).astype(jnp.float32),
        w5_row=jnp.pad(w5.reshape(1, H4),
                       ((0, 0), (0, H4_pad - H4))).astype(jnp.float32),
        b5=b5.reshape(1, 1).astype(jnp.float32),
    )


# ------------------------------- Wrapper -----------------------------------

def discriminator_forward(x, prepped, *, tile_b=512):
    """x: [B, D] float32.  prepped: output of preprocess_params().

    Returns sigmoid(MLP(x)) of shape [B, 1] in float32.
    """
    B, D = x.shape
    assert D == prepped["D"], "feature dim mismatch vs preprocessed params"
    cdt = prepped["compute_dtype"]
    D_pad = prepped["D_pad"]

    # --- batch tiling: tiny batches run as one padded tile; large batches use
    # tiles <= tile_b with >= 2 grid steps (v7x: both TensorCores get work).
    B_min = _round_up(B, 8)
    if B_min <= 256:
        tile_b_eff = B_min
    else:
        tile_b_eff = min(tile_b, _round_up((B_min + 1) // 2, 8))
    B_pad = _round_up(B, tile_b_eff)

    # Only per-call data prep: pad batch rows (+ feature dim to mult-of-8,
    # a no-op for D=40) and cast to the MXU operand dtype.
    x_p = jnp.pad(x, ((0, B_pad - B), (0, D_pad - D))).astype(cdt)

    weights = (prepped["w1"], prepped["b1"],
               prepped["w2"], prepped["b2"],
               prepped["w3"], prepped["b3"],
               prepped["w4"], prepped["b4"],
               prepped["w5_row"], prepped["b5"])

    def full_spec(arr):
        # Whole (small) array resident in VMEM; block index never changes.
        return pl.BlockSpec(arr.shape, lambda i: (0, 0))

    grid = (B_pad // tile_b_eff,)

    out = pl.pallas_call(
        _discriminator_kernel,
        out_shape=jax.ShapeDtypeStruct((B_pad, 1), jnp.float32),
        grid_spec=pltpu.PrefetchScalarGridSpec(
            num_scalar_prefetch=0,
            grid=grid,
            in_specs=[pl.BlockSpec((tile_b_eff, D_pad), lambda i: (i, 0))]
                     + [full_spec(w) for w in weights],
            out_specs=pl.BlockSpec((tile_b_eff, 1), lambda i: (i, 0)),
        ),
        compiler_params=pltpu.CompilerParams(
            dimension_semantics=("parallel",),
        ),
    )(x_p, *weights)

    return out[:B]


# --------------------------- Parameter creation -----------------------------

def init_params(key, output_dim):
    """Deterministic init matching PyTorch Linear's U(-1/sqrt(fan_in), ...)."""
    dims = [output_dim, 128, 256, 128, 64, 1]
    params = []
    for i in range(len(dims) - 1):
        fan_in, fan_out = dims[i], dims[i + 1]
        key, kw, kb = jax.random.split(key, 3)
        bound = 1.0 / jnp.sqrt(jnp.float32(fan_in))
        w = jax.random.uniform(kw, (fan_in, fan_out), jnp.float32, -bound, bound)
        b = jax.random.uniform(kb, (1, fan_out), jnp.float32, -bound, bound)
        params.append((w, b))
    return params


def reference_forward(x, params):
    """Plain-JAX reference for correctness check."""
    h = x
    for i, (w, b) in enumerate(params):
        h = h @ w + b
        if i < len(params) - 1:
            h = jnp.maximum(h, 0.0)
    return 1.0 / (1.0 + jnp.exp(-h))


# --------------------------------- Main -------------------------------------

if __name__ == "__main__":
    key = jax.random.PRNGKey(0)
    k_x, k_x2, k_p = jax.random.split(key, 3)

    # output_dim (= latent_dim) depends on a CSV in the original; pick a small
    # deterministic value here.
    # TODO(synk): latent_dim is derived from an external CSV in the original
    # script; fixed to 40 here since the data is not available in-script.
    output_dim = 40
    batch = 16

    x = jax.random.normal(k_x, (batch, output_dim), jnp.float32)
    params = init_params(k_p, output_dim)
    y_ref = reference_forward(x, params)

    # Default path: bf16 MXU operands (all generations), f32 everywhere else.
    prepped_bf16 = preprocess_params(params, use_bf16=True)
    y_bf16 = jax.block_until_ready(discriminator_forward(x, prepped_bf16))
    assert y_bf16.shape == (batch, 1)
    assert jnp.allclose(y_bf16, y_ref, atol=5e-2, rtol=5e-2), "bf16 mismatch vs reference"

    # Full-f32 MXU path (tight tolerance).
    prepped_f32 = preprocess_params(params, use_bf16=False)
    y_f32 = jax.block_until_ready(discriminator_forward(x, prepped_f32))
    assert y_f32.shape == (batch, 1)
    assert jnp.allclose(y_f32, y_ref, atol=1e-5, rtol=1e-5), "f32 mismatch vs reference"

    # Multi-tile path (grid > 1, batch padding) at a modest batch size.
    batch2 = 1040
    x2 = jax.random.normal(k_x2, (batch2, output_dim), jnp.float32)
    y2_ref = reference_forward(x2, params)
    y2 = jax.block_until_ready(discriminator_forward(x2, prepped_bf16))
    assert y2.shape == (batch2, 1)
    assert jnp.allclose(y2, y2_ref, atol=5e-2, rtol=5e-2), "multi-tile mismatch vs reference"

    print("KERNEL_OK")
</pallas_src>

<mosaic_0001>
module attributes {stable_mosaic.version = 11 : i64} {
  func.func @_discriminator_kernel(%arg0: i32, %arg1: memref<16x40xbf16, #tpu.memory_space<vmem>>, %arg2: memref<40x128xbf16, #tpu.memory_space<vmem>>, %arg3: memref<1x128xf32, #tpu.memory_space<vmem>>, %arg4: memref<128x256xbf16, #tpu.memory_space<vmem>>, %arg5: memref<1x256xf32, #tpu.memory_space<vmem>>, %arg6: memref<256x128xbf16, #tpu.memory_space<vmem>>, %arg7: memref<1x128xf32, #tpu.memory_space<vmem>>, %arg8: memref<128x128xbf16, #tpu.memory_space<vmem>>, %arg9: memref<1x128xf32, #tpu.memory_space<vmem>>, %arg10: memref<1x128xf32, #tpu.memory_space<vmem>>, %arg11: memref<1x1xf32, #tpu.memory_space<vmem>>, %arg12: memref<16x1xf32, #tpu.memory_space<vmem>>) attributes {dimension_semantics = [#tpu.dimension_semantics<parallel>], iteration_bounds = array<i64: 1>, scalar_prefetch = 0 : i64, scratch_operands = 0 : i64, tpu.core_type = #tpu.core_type<tc>, window_params = [{transform_indices = @transform_0, window_bounds = array<i64: 16, 40>}, {pipeline_mode = #tpu.pipeline_mode<synchronous>, transform_indices = @transform_1, window_bounds = array<i64: 40, 128>}, {pipeline_mode = #tpu.pipeline_mode<synchronous>, transform_indices = @transform_2, window_bounds = array<i64: 1, 128>}, {pipeline_mode = #tpu.pipeline_mode<synchronous>, transform_indices = @transform_3, window_bounds = array<i64: 128, 256>}, {pipeline_mode = #tpu.pipeline_mode<synchronous>, transform_indices = @transform_4, window_bounds = array<i64: 1, 256>}, {pipeline_mode = #tpu.pipeline_mode<synchronous>, transform_indices = @transform_5, window_bounds = array<i64: 256, 128>}, {pipeline_mode = #tpu.pipeline_mode<synchronous>, transform_indices = @transform_6, window_bounds = array<i64: 1, 128>}, {pipeline_mode = #tpu.pipeline_mode<synchronous>, transform_indices = @transform_7, window_bounds = array<i64: 128, 128>}, {pipeline_mode = #tpu.pipeline_mode<synchronous>, transform_indices = @transform_8, window_bounds = array<i64: 1, 128>}, {pipeline_mode = #tpu.pipeline_mode<synchronous>, transform_indices = @transform_9, window_bounds = array<i64: 1, 128>}, {pipeline_mode = #tpu.pipeline_mode<synchronous>, transform_indices = @transform_10, window_bounds = array<i64: 1, 1>}, {transform_indices = @transform_11, window_bounds = array<i64: 16, 1>}]} {
    %c0 = arith.constant 0 : index
    %c0_0 = arith.constant 0 : index
    %0 = vector.load %arg1[%c0, %c0_0] : memref<16x40xbf16, #tpu.memory_space<vmem>>, vector<16x40xbf16>
    %c0_1 = arith.constant 0 : index
    %c0_2 = arith.constant 0 : index
    %1 = vector.load %arg2[%c0_1, %c0_2] : memref<40x128xbf16, #tpu.memory_space<vmem>>, vector<40x128xbf16>
    %cst = arith.constant dense<0.000000e+00> : vector<16x128xf32>
    %2 = tpu.matmul %0, %1, %cst {dimension_numbers = #tpu.dot_dimension_numbers<[1], [0], [0], [1], [0, 0, 1, 1], [], []>} : vector<16x40xbf16>, vector<40x128xbf16>, vector<16x128xf32> -> vector<16x128xf32>
    %c0_3 = arith.constant 0 : index
    %c0_4 = arith.constant 0 : index
    %3 = vector.load %arg3[%c0_3, %c0_4] : memref<1x128xf32, #tpu.memory_space<vmem>>, vector<1x128xf32>
    %4 = vector.broadcast %3 : vector<1x128xf32> to vector<16x128xf32>
    %5 = arith.addf %2, %4 : vector<16x128xf32>
    %cst_5 = arith.constant 0.000000e+00 : f32
    %6 = vector.broadcast %cst_5 : f32 to vector<16x128xf32>
    %7 = arith.maximumf %5, %6 : vector<16x128xf32>
    %8 = arith.truncf %7 : vector<16x128xf32> to vector<16x128xbf16>
    %c0_6 = arith.constant 0 : index
    %c0_7 = arith.constant 0 : index
    %9 = vector.load %arg4[%c0_6, %c0_7] : memref<128x256xbf16, #tpu.memory_space<vmem>>, vector<128x256xbf16>
    %cst_8 = arith.constant dense<0.000000e+00> : vector<16x256xf32>
    %10 = tpu.matmul %8, %9, %cst_8 {dimension_numbers = #tpu.dot_dimension_numbers<[1], [0], [0], [1], [0, 0, 1, 1], [], []>} : vector<16x128xbf16>, vector<128x256xbf16>, vector<16x256xf32> -> vector<16x256xf32>
    %c0_9 = arith.constant 0 : index
    %c0_10 = arith.constant 0 : index
    %11 = vector.load %arg5[%c0_9, %c0_10] : memref<1x256xf32, #tpu.memory_space<vmem>>, vector<1x256xf32>
    %12 = vector.broadcast %11 : vector<1x256xf32> to vector<16x256xf32>
    %13 = arith.addf %10, %12 : vector<16x256xf32>
    %cst_11 = arith.constant 0.000000e+00 : f32
    %14 = vector.broadcast %cst_11 : f32 to vector<16x256xf32>
    %15 = arith.maximumf %13, %14 : vector<16x256xf32>
    %16 = arith.truncf %15 : vector<16x256xf32> to vector<16x256xbf16>
    %c0_12 = arith.constant 0 : index
    %c0_13 = arith.constant 0 : index
    %17 = vector.load %arg6[%c0_12, %c0_13] : memref<256x128xbf16, #tpu.memory_space<vmem>>, vector<256x128xbf16>
    %cst_14 = arith.constant dense<0.000000e+00> : vector<16x128xf32>
    %18 = tpu.matmul %16, %17, %cst_14 {dimension_numbers = #tpu.dot_dimension_numbers<[1], [0], [0], [1], [0, 0, 1, 1], [], []>} : vector<16x256xbf16>, vector<256x128xbf16>, vector<16x128xf32> -> vector<16x128xf32>
    %c0_15 = arith.constant 0 : index
    %c0_16 = arith.constant 0 : index
    %19 = vector.load %arg7[%c0_15, %c0_16] : memref<1x128xf32, #tpu.memory_space<vmem>>, vector<1x128xf32>
    %20 = vector.broadcast %19 : vector<1x128xf32> to vector<16x128xf32>
    %21 = arith.addf %18, %20 : vector<16x128xf32>
    %cst_17 = arith.constant 0.000000e+00 : f32
    %22 = vector.broadcast %cst_17 : f32 to vector<16x128xf32>
    %23 = arith.maximumf %21, %22 : vector<16x128xf32>
    %24 = arith.truncf %23 : vector<16x128xf32> to vector<16x128xbf16>
    %c0_18 = arith.constant 0 : index
    %c0_19 = arith.constant 0 : index
    %25 = vector.load %arg8[%c0_18, %c0_19] : memref<128x128xbf16, #tpu.memory_space<vmem>>, vector<128x128xbf16>
    %cst_20 = arith.constant dense<0.000000e+00> : vector<16x128xf32>
    %26 = tpu.matmul %24, %25, %cst_20 {dimension_numbers = #tpu.dot_dimension_numbers<[1], [0], [0], [1], [0, 0, 1, 1], [], []>} : vector<16x128xbf16>, vector<128x128xbf16>, vector<16x128xf32> -> vector<16x128xf32>
    %c0_21 = arith.constant 0 : index
    %c0_22 = arith.constant 0 : index
    %27 = vector.load %arg9[%c0_21, %c0_22] : memref<1x128xf32, #tpu.memory_space<vmem>>, vector<1x128xf32>
    %28 = vector.broadcast %27 : vector<1x128xf32> to vector<16x128xf32>
    %29 = arith.addf %26, %28 : vector<16x128xf32>
    %cst_23 = arith.constant 0.000000e+00 : f32
    %30 = vector.broadcast %cst_23 : f32 to vector<16x128xf32>
    %31 = arith.maximumf %29, %30 : vector<16x128xf32>
    %c0_24 = arith.constant 0 : index
    %c0_25 = arith.constant 0 : index
    %32 = vector.load %arg10[%c0_24, %c0_25] : memref<1x128xf32, #tpu.memory_space<vmem>>, vector<1x128xf32>
    %33 = vector.broadcast %32 : vector<1x128xf32> to vector<16x128xf32>
    %34 = arith.mulf %31, %33 : vector<16x128xf32>
    %cst_26 = arith.constant dense<0.000000e+00> : vector<16xf32>
    %35 = vector.multi_reduction <add>, %34, %cst_26 [1] : vector<16x128xf32> to vector<16xf32>
    %36 = vector.shape_cast %35 : vector<16xf32> to vector<16x1xf32>
    %c0_27 = arith.constant 0 : index
    %c0_28 = arith.constant 0 : index
    %37 = vector.load %arg11[%c0_27, %c0_28] : memref<1x1xf32, #tpu.memory_space<vmem>>, vector<1x1xf32>
    %38 = vector.broadcast %37 : vector<1x1xf32> to vector<16x1xf32>
    %39 = arith.addf %36, %38 : vector<16x1xf32>
    %cst_29 = arith.constant 0.000000e+00 : f32
    %40 = vector.broadcast %cst_29 : f32 to vector<16x1xf32>
    %41 = arith.subf %40, %39 : vector<16x1xf32>
    %42 = math.exp %41 : vector<16x1xf32>
    %cst_30 = arith.constant 1.000000e+00 : f32
    %43 = vector.broadcast %cst_30 : f32 to vector<16x1xf32>
    %44 = arith.addf %43, %42 : vector<16x1xf32>
    %45 = tpu.reciprocal %44 : vector<16x1xf32> -> vector<16x1xf32>
    %c0_31 = arith.constant 0 : index
    %c0_32 = arith.constant 0 : index
    %46 = vector.load %arg12[%c0_31, %c0_32] : memref<16x1xf32, #tpu.memory_space<vmem>>, vector<16x1xf32>
    tpu.vector_store %arg12[%c0_31, %c0_32], %45 {strides = array<i32>} : memref<16x1xf32, #tpu.memory_space<vmem>>, vector<16x1xf32>,
    return
  }
  func.func @transform_0(%arg0: i32) -> (i32, i32) {
    %c0_i32 = arith.constant 0 : i32
    %c0_i32_0 = arith.constant 0 : i32
    return %arg0, %c0_i32 : i32, i32
  }
  func.func @transform_1(%arg0: i32) -> (i32, i32) {
    %c0_i32 = arith.constant 0 : i32
    %c0_i32_0 = arith.constant 0 : i32
    %c0_i32_1 = arith.constant 0 : i32
    return %c0_i32, %c0_i32_0 : i32, i32
  }
  func.func @transform_2(%arg0: i32) -> (i32, i32) {
    %c0_i32 = arith.constant 0 : i32
    %c0_i32_0 = arith.constant 0 : i32
    %c0_i32_1 = arith.constant 0 : i32
    return %c0_i32, %c0_i32_0 : i32, i32
  }
  func.func @transform_3(%arg0: i32) -> (i32, i32) {
    %c0_i32 = arith.constant 0 : i32
    %c0_i32_0 = arith.constant 0 : i32
    %c0_i32_1 = arith.constant 0 : i32
    return %c0_i32, %c0_i32_0 : i32, i32
  }
  func.func @transform_4(%arg0: i32) -> (i32, i32) {
    %c0_i32 = arith.constant 0 : i32
    %c0_i32_0 = arith.constant 0 : i32
    %c0_i32_1 = arith.constant 0 : i32
    return %c0_i32, %c0_i32_0 : i32, i32
  }
  func.func @transform_5(%arg0: i32) -> (i32, i32) {
    %c0_i32 = arith.constant 0 : i32
    %c0_i32_0 = arith.constant 0 : i32
    %c0_i32_1 = arith.constant 0 : i32
    return %c0_i32, %c0_i32_0 : i32, i32
  }
  func.func @transform_6(%arg0: i32) -> (i32, i32) {
    %c0_i32 = arith.constant 0 : i32
    %c0_i32_0 = arith.constant 0 : i32
    %c0_i32_1 = arith.constant 0 : i32
    return %c0_i32, %c0_i32_0 : i32, i32
  }
  func.func @transform_7(%arg0: i32) -> (i32, i32) {
    %c0_i32 = arith.constant 0 : i32
    %c0_i32_0 = arith.constant 0 : i32
    %c0_i32_1 = arith.constant 0 : i32
    return %c0_i32, %c0_i32_0 : i32, i32
  }
  func.func @transform_8(%arg0: i32) -> (i32, i32) {
    %c0_i32 = arith.constant 0 : i32
    %c0_i32_0 = arith.constant 0 : i32
    %c0_i32_1 = arith.constant 0 : i32
    return %c0_i32, %c0_i32_0 : i32, i32
  }
  func.func @transform_9(%arg0: i32) -> (i32, i32) {
    %c0_i32 = arith.constant 0 : i32
    %c0_i32_0 = arith.constant 0 : i32
    %c0_i32_1 = arith.constant 0 : i32
    return %c0_i32, %c0_i32_0 : i32, i32
  }
  func.func @transform_10(%arg0: i32) -> (i32, i32) {
    %c0_i32 = arith.constant 0 : i32
    %c0_i32_0 = arith.constant 0 : i32
    %c0_i32_1 = arith.constant 0 : i32
    return %c0_i32, %c0_i32_0 : i32, i32
  }
  func.func @transform_11(%arg0: i32) -> (i32, i32) {
    %c0_i32 = arith.constant 0 : i32
    %c0_i32_0 = arith.constant 0 : i32
    return %arg0, %c0_i32 : i32, i32
  }
}

</mosaic_0001>

<llo_original>
// kernel: tpu_custom_call.1
$region0: #{tpu_custom_call.1}
  #allocation0 [shape = 'u32[]', space=smem, size = 0x4, offset = 0x4, fixed_abs, tag = 'smem constant byte address 0x4 - core index']
  #allocation1 [shape = 'u32[144,128]{1,0:T(1,128)}', space=vmem, size = 0x12000, scoped, tag = 'internal scratch']
  #allocation2 [shape = 'f32[1,1]{1,0:T(1,128)S(1)}', space=vmem, size = 0x200, scoped, tag = 'scoped memory for tpu_custom_call.1']
  %s0 = inlined_call_operand.hbm [shape: bf16[16,40], index: 0, kind: input, shape index: {}]
  %s1 = inlined_call_operand.hbm [shape: bf16[40,128], index: 1, kind: input, shape index: {}]
  %s2 = inlined_call_operand.vmem [shape: f32[1,128], index: 2, kind: input, shape index: {}]
  %s3 = inlined_call_operand.hbm [shape: bf16[128,256], index: 3, kind: input, shape index: {}]
  %s4 = inlined_call_operand.vmem [shape: f32[1,256], index: 4, kind: input, shape index: {}]
  %s5 = inlined_call_operand.hbm [shape: bf16[256,128], index: 5, kind: input, shape index: {}]
  %s6 = inlined_call_operand.vmem [shape: f32[1,128], index: 6, kind: input, shape index: {}]
  %s7 = inlined_call_operand.hbm [shape: bf16[128,128], index: 7, kind: input, shape index: {}]
  %s8 = inlined_call_operand.vmem [shape: f32[1,128], index: 8, kind: input, shape index: {}]
  %s9 = inlined_call_operand.vmem [shape: f32[1,128], index: 9, kind: input, shape index: {}]
  %s10 = inlined_call_operand.<no memory space> [shape: f32[1,1], index: 10, kind: input, shape index: {}]
  %s11 = inlined_call_operand.vmem [shape: f32[16,1], index: 11, kind: output, shape index: {}]
  %s12 = sld [smem:[#allocation0]]
  $region74: #{tpu_custom_call.1} parent=0
    _
  %s14 = ssub.s32 1, %s12
  %s15 = scalar_select 0, %s14, %s12
  %v16 = vstv %s10
  %17 = vst [vmem:[#allocation2] sm:$0x1] %v16
  $region1: #{tpu_custom_call.1} parent=0
    #allocation3 [shape = 'u8[4096]{0}', space=vmem, size = 0x1000, scoped, tag = 'input window, operand 0, single buffered']
    #allocation4 [shape = 's32[1]{0}', space=sflag, size = 0x4, scoped, tag = 'scoped memory for tpu_custom_call.1']
    #allocation5 [shape = 'u8[10240]{0}', space=vmem, size = 0x2800, scoped, tag = 'input window, operand 1, single buffered']
    #allocation6 [shape = 's32[1]{0}', space=sflag, size = 0x4, scoped, tag = 'scoped memory for tpu_custom_call.1']
    #allocation7 [shape = 'u8[65536]{0}', space=vmem, size = 0x10000, scoped, tag = 'input window, operand 3, single buffered']
    #allocation8 [shape = 'u8[65536]{0}', space=vmem, size = 0x10000, scoped, tag = 'input window, operand 5, single buffered']
    #allocation9 [shape = 's32[1]{0}', space=sflag, size = 0x4, scoped, tag = 'scoped memory for tpu_custom_call.1']
    #allocation10 [shape = 'u8[32768]{0}', space=vmem, size = 0x8000, scoped, tag = 'input window, operand 7, single buffered']
    %18 = vsyncpa [#allocation4], 0
    %19 = vsyncpa [#allocation6], 0
    %20 = vsyncpa [#allocation9], 0
    // Predicated region
    $region2: #{tpu_custom_call.1} parent=1 // pred_check
      _
    $region3: #{tpu_custom_call.1} parent=1 // pred_check_branch
      %22 = sbr.rel (0) target = $region5
    $region4: #{tpu_custom_call.1} parent=1 // pred_region
      %s24 = ssub.s32 128, 128
      %25 = vsyncadd [#allocation4], %s24
      %s26 = sshll.u32 [#allocation3], 4
      %s27 = int_to_ptr.vmem [resolvable:$true] %s26
      %32 = dma.hbm_to_vmem [thread:$0]  %s0, 128, %s27, [#allocation4], 64, 64, 4
    $region5: #{tpu_custom_call.1} parent=1 // pred_fallthru
      _
    // Predicated region
    $region6: #{tpu_custom_call.1} parent=1 // pred_check
      _
    $region7: #{tpu_custom_call.1} parent=1 // pred_check_branch
      %34 = sbr.rel (0) target = $region9
    $region8: #{tpu_custom_call.1} parent=1 // pred_region
      %s36 = ssub.s32 320, 320
      %37 = vsyncadd [#allocation6], %s36
      %s38 = sshll.u32 [#allocation5], 4
      %s39 = int_to_ptr.vmem [resolvable:$true] %s38
      %44 = dma.hbm_to_vmem [thread:$0]  %s1, 320, %s39, [#allocation6], 64, 64, 4
    $region9: #{tpu_custom_call.1} parent=1 // pred_fallthru
      _
    // Predicated region
    $region10: #{tpu_custom_call.1} parent=1 // pred_check
      _
    $region11: #{tpu_custom_call.1} parent=1 // pred_check_branch
      %46 = sbr.rel (0) target = $region13
    $region12: #{tpu_custom_call.1} parent=1 // pred_region
      _
    $region13: #{tpu_custom_call.1} parent=1 // pred_fallthru
      _
    // Predicated region
    $region14: #{tpu_custom_call.1} parent=1 // pred_check
      _
    $region15: #{tpu_custom_call.1} parent=1 // pred_check_branch
      %48 = sbr.rel (0) target = $region17
    $region16: #{tpu_custom_call.1} parent=1 // pred_region
      %s50 = ssub.s32 2048, 2048
      %51 = vsyncadd [#allocation6], %s50
      %s52 = sshll.u32 [#allocation7], 4
      %s53 = int_to_ptr.vmem [resolvable:$true] %s52
      %58 = dma.hbm_to_vmem [thread:$0]  %s3, 2048, %s53, [#allocation6], 128, 128, 8
    $region17: #{tpu_custom_call.1} parent=1 // pred_fallthru
      _
    // Predicated region
    $region18: #{tpu_custom_call.1} parent=1 // pred_check
      _
    $region19: #{tpu_custom_call.1} parent=1 // pred_check_branch
      %60 = sbr.rel (0) target = $region21
    $region20: #{tpu_custom_call.1} parent=1 // pred_region
      _
    $region21: #{tpu_custom_call.1} parent=1 // pred_fallthru
      _
    // Predicated region
    $region22: #{tpu_custom_call.1} parent=1 // pred_check
      _
    $region23: #{tpu_custom_call.1} parent=1 // pred_check_branch
      %62 = sbr.rel (0) target = $region25
    $region24: #{tpu_custom_call.1} parent=1 // pred_region
      %s64 = ssub.s32 2048, 2048
      %65 = vsyncadd [#allocation9], %s64
      %s66 = sshll.u32 [#allocation8], 4
      %s67 = int_to_ptr.vmem [resolvable:$true] %s66
      %72 = dma.hbm_to_vmem [thread:$0]  %s5, 2048, %s67, [#allocation9], 64, 64, 4
    $region25: #{tpu_custom_call.1} parent=1 // pred_fallthru
      _
    // Predicated region
    $region26: #{tpu_custom_call.1} parent=1 // pred_check
      _
    $region27: #{tpu_custom_call.1} parent=1 // pred_check_branch
      %74 = sbr.rel (0) target = $region29
    $region28: #{tpu_custom_call.1} parent=1 // pred_region
      _
    $region29: #{tpu_custom_call.1} parent=1 // pred_fallthru
      _
    // Predicated region
    $region30: #{tpu_custom_call.1} parent=1 // pred_check
      _
    $region31: #{tpu_custom_call.1} parent=1 // pred_check_branch
      %76 = sbr.rel (0) target = $region33
    $region32: #{tpu_custom_call.1} parent=1 // pred_region
      %s78 = ssub.s32 1024, 1024
      %79 = vsyncadd [#allocation9], %s78
      %s80 = sshll.u32 [#allocation10], 4
      %s81 = int_to_ptr.vmem [resolvable:$true] %s80
      %86 = dma.hbm_to_vmem [thread:$0]  %s7, 1024, %s81, [#allocation9], 64, 64, 4
    $region33: #{tpu_custom_call.1} parent=1 // pred_fallthru
      _
    // Predicated region
    $region34: #{tpu_custom_call.1} parent=1 // pred_check
      _
    $region35: #{tpu_custom_call.1} parent=1 // pred_check_branch
      %88 = sbr.rel (0) target = $region37
    $region36: #{tpu_custom_call.1} parent=1 // pred_region
      _
    $region37: #{tpu_custom_call.1} parent=1 // pred_fallthru
      _
    // Predicated region
    $region38: #{tpu_custom_call.1} parent=1 // pred_check
      _
    $region39: #{tpu_custom_call.1} parent=1 // pred_check_branch
      %90 = sbr.rel (0) target = $region41
    $region40: #{tpu_custom_call.1} parent=1 // pred_region
      _
    $region41: #{tpu_custom_call.1} parent=1 // pred_fallthru
      _
    // Predicated region
    $region42: #{tpu_custom_call.1} parent=1 // pred_check
      _
    $region43: #{tpu_custom_call.1} parent=1 // pred_check_branch
      %92 = sbr.rel (0) target = $region45
    $region44: #{tpu_custom_call.1} parent=1 // pred_region
      _
    $region45: #{tpu_custom_call.1} parent=1 // pred_fallthru
      _
    // Predicated region
    $region46: #{tpu_custom_call.1} parent=1 // pred_check
      _
    $region47: #{tpu_custom_call.1} parent=1 // pred_check_branch
      %94 = sbr.rel (0) target = $region49
    $region48: #{tpu_custom_call.1} parent=1 // pred_region
      %95 = dma.done [#allocation4], 128
    $region49: #{tpu_custom_call.1} parent=1 // pred_fallthru
      _
    // Predicated region
    $region50: #{tpu_custom_call.1} parent=1 // pred_check
      _
    $region51: #{tpu_custom_call.1} parent=1 // pred_check_branch
      %97 = sbr.rel (0) target = $region53
    $region52: #{tpu_custom_call.1} parent=1 // pred_region
      %98 = dma.done [#allocation6], 320
    $region53: #{tpu_custom_call.1} parent=1 // pred_fallthru
      _
    // Predicated region
    $region54: #{tpu_custom_call.1} parent=1 // pred_check
      _
    $region55: #{tpu_custom_call.1} parent=1 // pred_check_branch
      %100 = sbr.rel (0) target = $region57
    $region56: #{tpu_custom_call.1} parent=1 // pred_region
      %101 = dma.done [#allocation6], 2048
    $region57: #{tpu_custom_call.1} parent=1 // pred_fallthru
      _
    // Predicated region
    $region58: #{tpu_custom_call.1} parent=1 // pred_check
      _
    $region59: #{tpu_custom_call.1} parent=1 // pred_check_branch
      %103 = sbr.rel (0) target = $region61
    $region60: #{tpu_custom_call.1} parent=1 // pred_region
      %104 = dma.done [#allocation9], 2048
    $region61: #{tpu_custom_call.1} parent=1 // pred_fallthru
      _
    // Predicated region
    $region62: #{tpu_custom_call.1} parent=1 // pred_check
      _
    $region63: #{tpu_custom_call.1} parent=1 // pred_check_branch
      %106 = sbr.rel (0) target = $region65
    $region64: #{tpu_custom_call.1} parent=1 // pred_region
      %107 = dma.done [#allocation9], 1024
    $region65: #{tpu_custom_call.1} parent=1 // pred_fallthru
      _
    %v109 = vld [vmem:[#allocation3] sm:$0xf]
    %v110 = vld [vmem:[#allocation3 + $0x4] sm:$0xf]
    %v111 = vld [vmem:[#allocation5] sm:$0xf]
    %v112 = vld [vmem:[#allocation5 + $0x4] sm:$0xf]
    %v113 = vld [vmem:[#allocation5 + $0x8] sm:$0xf]
    %v114 = vld [vmem:[#allocation5 + $0xc] sm:$0xf]
    %v115 = vld [vmem:[#allocation5 + $0x10] sm:$0xf]
    %v116 = vld [vmem:[%s2] sm:$0x1]
    %v118 = vlaneseq
    %v119 = vshrl.u32 %v118, 7
    %v120 = vsub.s32 0, %v119
    %v121 = vrot.slane %v116, %v120
    %v125 = vunpack.c.l.b16 %v109
    %v126 = vunpack.c.l.b16 %v110
    %v127 = vpack.c.b16 %v126, %v125
    %v133 = vunpack.c.l.b16 %v111
    %v134 = vunpack.c.l.b16 %v112
    %v135 = vunpack.c.l.b16 %v113
    %v136 = vunpack.c.l.b16 %v114
    %v137 = vunpack.c.l.b16 %v115
    %v138 = vpack.c.b16 %v134, %v133
    %v139 = vpack.c.b16 %v136, %v135
    %v140 = vpack.c.b16 %v137, %v137
    %vm143 = vcmask 326656
    %v145 = vsel %vm143, %v127, 0
    %vm147 = vcmask 1043456
    %v149 = vsel %vm147, %v140, 0
    %151 = vmatprep.subr.bf16.mxu0 0
    %152 = vmatpush1.bf16.msra.mxu0 %v138
    %153 = vmatprep.subr.bf16.mxu0 0
    %154 = vmatpush1.bf16.msra.mxu0 %v139
    %155 = vmatprep.subr.bf16.mxu0 0
    %156 = vmatpush1.bf16.msra.mxu0 %v149
    %157 = vmatprep.subr.bf16.mxu0 0
    %158 = vmatpush1.bf16.msra.mxu0 0
    %159 = vmatprep.subr.bf16.mxu0 0
    %160 = vmatpush1.bf16.msra.mxu0 0
    %161 = vmatprep.subr.bf16.mxu0 0
    %162 = vmatpush1.bf16.msra.mxu0 0
    %163 = vmatprep.subr.bf16.mxu0 0
    %164 = vmatpush1.bf16.msra.mxu0 0
    %165 = vmatprep.subr.bf16.mxu0 0
    %166 = vmatpush1.bf16.msra.mxu0 0
    %167 = vmatprep.subr.bf16.mxu0 0
    %168 = vmatpush1.bf16.msra.mxu0 0
    %169 = vmatprep.subr.bf16.mxu0 0
    %170 = vmatpush1.bf16.msra.mxu0 0
    %171 = vmatprep.subr.bf16.mxu0 0
    %172 = vmatpush1.bf16.msra.mxu0 0
    %173 = vmatprep.subr.bf16.mxu0 0
    %174 = vmatpush1.bf16.msra.mxu0 0
    %175 = vmatprep.subr.bf16.mxu0 0
    %176 = vmatpush1.bf16.msra.mxu0 0
    %177 = vmatprep.subr.bf16.mxu0 0
    %178 = vmatpush1.bf16.msra.mxu0 0
    %179 = vmatprep.subr.bf16.mxu0 0
    %180 = vmatpush1.bf16.msra.mxu0 0
    %181 = vmatprep.subr.bf16.mxu0 0
    %182 = vmatpush1.bf16.msra.mxu0 0
    %183 = vmatprep.mubr.bf16.mxu0 0
    %184 = vmatmul.mubr.bf16.gmra.mrb[0].mxu0 %v145
    %v185 = vpop.f32.mrb[0].mxu0
    %v186 = vadd.f32 %v121, %v185
    %v187 = vpop.f32.mrb[0].mxu0
    %v188 = vpop.f32.mrb[0].mxu0
    %v189 = vadd.f32 %v121, %v188
    %v190 = vpop.f32.mrb[0].mxu0
    %191 = vdwg.mxu0
    %v192 = vmax.f32 %v186, 0.0
    %v193 = vmax.f32 %v189, 0.0
    %v194 = vpack.c.bf16 %v193, %v192
    %v195 = vld [vmem:[#allocation7] sm:$0xff]
    %v196 = vld [vmem:[#allocation7 + $0x8] sm:$0xff]
    %v197 = vld [vmem:[#allocation7 + $0x10] sm:$0xff]
    %v198 = vld [vmem:[#allocation7 + $0x18] sm:$0xff]
    %v199 = vld [vmem:[#allocation7 + $0x20] sm:$0xff]
    %v200 = vld [vmem:[#allocation7 + $0x28] sm:$0xff]
    %v201 = vld [vmem:[#allocation7 + $0x30] sm:$0xff]
    %v202 = vld [vmem:[#allocation7 + $0x38] sm:$0xff]
    %v203 = vld [vmem:[#allocation7 + $0x40] sm:$0xff]
    %v204 = vld [vmem:[#allocation7 + $0x48] sm:$0xff]
    %v205 = vld [vmem:[#allocation7 + $0x50] sm:$0xff]
    %v206 = vld [vmem:[#allocation7 + $0x58] sm:$0xff]
    %v207 = vld [vmem:[#allocation7 + $0x60] sm:$0xff]
    %v208 = vld [vmem:[#allocation7 + $0x68] sm:$0xff]
    %v209 = vld [vmem:[#allocation7 + $0x70] sm:$0xff]
    %v210 = vld [vmem:[#allocation7 + $0x78] sm:$0xff]
    %v211 = vld [vmem:[%s4] sm:$0x3]
    %v213 = vlaneseq
    %v214 = vshrl.u32 %v213, 7
    %v215 = vsub.s32 0, %v214
    %v216 = vrot.slane %v211, %v215
    %v217 = vlaneseq
    %v218 = vshrl.u32 %v217, 7
    %v219 = vsub.s32 1, %v218
    %v220 = vrot.slane %v211, %v219
    %v239 = vunpack.c.l.b16 %v195
    %v240 = vunpack.c.h.b16 %v195
    %v241 = vunpack.c.l.b16 %v196
    %v242 = vunpack.c.h.b16 %v196
    %v243 = vunpack.c.l.b16 %v197
    %v244 = vunpack.c.h.b16 %v197
    %v245 = vunpack.c.l.b16 %v198
    %v246 = vunpack.c.h.b16 %v198
    %v247 = vunpack.c.l.b16 %v199
    %v248 = vunpack.c.h.b16 %v199
    %v249 = vunpack.c.l.b16 %v200
    %v250 = vunpack.c.h.b16 %v200
    %v251 = vunpack.c.l.b16 %v201
    %v252 = vunpack.c.h.b16 %v201
    %v253 = vunpack.c.l.b16 %v202
    %v254 = vunpack.c.h.b16 %v202
    %v255 = vunpack.c.l.b16 %v203
    %v256 = vunpack.c.h.b16 %v203
    %v257 = vunpack.c.l.b16 %v204
    %v258 = vunpack.c.h.b16 %v204
    %v259 = vunpack.c.l.b16 %v205
    %v260 = vunpack.c.h.b16 %v205
    %v261 = vunpack.c.l.b16 %v206
    %v262 = vunpack.c.h.b16 %v206
    %v263 = vunpack.c.l.b16 %v207
    %v264 = vunpack.c.h.b16 %v207
    %v265 = vunpack.c.l.b16 %v208
    %v266 = vunpack.c.h.b16 %v208
    %v267 = vunpack.c.l.b16 %v209
    %v268 = vunpack.c.h.b16 %v209
    %v269 = vunpack.c.l.b16 %v210
    %v270 = vunpack.c.h.b16 %v210
    %v271 = vpack.c.b16 %v241, %v239
    %v272 = vpack.c.b16 %v242, %v240
    %v273 = vpack.c.b16 %v245, %v243
    %v274 = vpack.c.b16 %v246, %v244
    %v275 = vpack.c.b16 %v249, %v247
    %v276 = vpack.c.b16 %v250, %v248
    %v277 = vpack.c.b16 %v253, %v251
    %v278 = vpack.c.b16 %v254, %v252
    %v279 = vpack.c.b16 %v257, %v255
    %v280 = vpack.c.b16 %v258, %v256
    %v281 = vpack.c.b16 %v261, %v259
    %v282 = vpack.c.b16 %v262, %v260
    %v283 = vpack.c.b16 %v265, %v263
    %v284 = vpack.c.b16 %v266, %v264
    %v285 = vpack.c.b16 %v269, %v267
    %v286 = vpack.c.b16 %v270, %v268
    %303 = vmatprep.subr.bf16.mxu0 %v272
    %304 = vmatpush1.bf16.msra.mxu0 %v271
    %305 = vmatprep.subr.bf16.mxu0 %v274
    %306 = vmatpush1.bf16.msra.mxu0 %v273
    %307 = vmatprep.subr.bf16.mxu0 %v276
    %308 = vmatpush1.bf16.msra.mxu0 %v275
    %309 = vmatprep.subr.bf16.mxu0 %v278
    %310 = vmatpush1.bf16.msra.mxu0 %v277
    %311 = vmatprep.subr.bf16.mxu0 %v280
    %312 = vmatpush1.bf16.msra.mxu0 %v279
    %313 = vmatprep.subr.bf16.mxu0 %v282
    %314 = vmatpush1.bf16.msra.mxu0 %v281
    %315 = vmatprep.subr.bf16.mxu0 %v284
    %316 = vmatpush1.bf16.msra.mxu0 %v283
    %317 = vmatprep.subr.bf16.mxu0 %v286
    %318 = vmatpush1.bf16.msra.mxu0 %v285
    %319 = vmatprep.subr.bf16.mxu0 0
    %320 = vmatpush1.bf16.msra.mxu0 0
    %321 = vmatprep.subr.bf16.mxu0 0
    %322 = vmatpush1.bf16.msra.mxu0 0
    %323 = vmatprep.subr.bf16.mxu0 0
    %324 = vmatpush1.bf16.msra.mxu0 0
    %325 = vmatprep.subr.bf16.mxu0 0
    %326 = vmatpush1.bf16.msra.mxu0 0
    %327 = vmatprep.subr.bf16.mxu0 0
    %328 = vmatpush1.bf16.msra.mxu0 0
    %329 = vmatprep.subr.bf16.mxu0 0
    %330 = vmatpush1.bf16.msra.mxu0 0
    %331 = vmatprep.subr.bf16.mxu0 0
    %332 = vmatpush1.bf16.msra.mxu0 0
    %333 = vmatprep.subr.bf16.mxu0 0
    %334 = vmatpush1.bf16.msra.mxu0 0
    %335 = vmatprep.mubr.bf16.mxu0 0
    %336 = vmatmul.mubr.bf16.gmra.mrb[0].mxu0 %v194
    %v337 = vpop.f32.mrb[0].mxu0
    %v338 = vadd.f32 %v216, %v337
    %v339 = vpop.f32.mrb[0].mxu0
    %v340 = vadd.f32 %v220, %v339
    %v341 = vpop.f32.mrb[0].mxu0
    %v342 = vadd.f32 %v216, %v341
    %v343 = vpop.f32.mrb[0].mxu0
    %v344 = vadd.f32 %v220, %v343
    %345 = vdwg.mxu0
    %v346 = vmax.f32 %v338, 0.0
    %v347 = vmax.f32 %v340, 0.0
    %v348 = vmax.f32 %v342, 0.0
    %v349 = vmax.f32 %v344, 0.0
    %v350 = vpack.c.bf16 %v348, %v346
    %v351 = vpack.c.bf16 %v349, %v347
    %v352 = vld [vmem:[#allocation8] sm:$0xf]
    %v353 = vld [vmem:[#allocation8 + $0x4] sm:$0xf]
    %v354 = vld [vmem:[#allocation8 + $0x8] sm:$0xf]
    %v355 = vld [vmem:[#allocation8 + $0xc] sm:$0xf]
    %v356 = vld [vmem:[#allocation8 + $0x10] sm:$0xf]
    %v357 = vld [vmem:[#allocation8 + $0x14] sm:$0xf]
    %v358 = vld [vmem:[#allocation8 + $0x18] sm:$0xf]
    %v359 = vld [vmem:[#allocation8 + $0x1c] sm:$0xf]
    %v360 = vld [vmem:[#allocation8 + $0x20] sm:$0xf]
    %v361 = vld [vmem:[#allocation8 + $0x24] sm:$0xf]
    %v362 = vld [vmem:[#allocation8 + $0x28] sm:$0xf]
    %v363 = vld [vmem:[#allocation8 + $0x2c] sm:$0xf]
    %v364 = vld [vmem:[#allocation8 + $0x30] sm:$0xf]
    %v365 = vld [vmem:[#allocation8 + $0x34] sm:$0xf]
    %v366 = vld [vmem:[#allocation8 + $0x38] sm:$0xf]
    %v367 = vld [vmem:[#allocation8 + $0x3c] sm:$0xf]
    %v368 = vld [vmem:[#allocation8 + $0x40] sm:$0xf]
    %v369 = vld [vmem:[#allocation8 + $0x44] sm:$0xf]
    %v370 = vld [vmem:[#allocation8 + $0x48] sm:$0xf]
    %v371 = vld [vmem:[#allocation8 + $0x4c] sm:$0xf]
    %v372 = vld [vmem:[#allocation8 + $0x50] sm:$0xf]
    %v373 = vld [vmem:[#allocation8 + $0x54] sm:$0xf]
    %v374 = vld [vmem:[#allocation8 + $0x58] sm:$0xf]
    %v375 = vld [vmem:[#allocation8 + $0x5c] sm:$0xf]
    %v376 = vld [vmem:[#allocation8 + $0x60] sm:$0xf]
    %v377 = vld [vmem:[#allocation8 + $0x64] sm:$0xf]
    %v378 = vld [vmem:[#allocation8 + $0x68] sm:$0xf]
    %v379 = vld [vmem:[#allocation8 + $0x6c] sm:$0xf]
    %v380 = vld [vmem:[#allocation8 + $0x70] sm:$0xf]
    %v381 = vld [vmem:[#allocation8 + $0x74] sm:$0xf]
    %v382 = vld [vmem:[#allocation8 + $0x78] sm:$0xf]
    %v383 = vld [vmem:[#allocation8 + $0x7c] sm:$0xf]
    %v384 = vld [vmem:[%s6] sm:$0x1]
    %v386 = vlaneseq
    %v387 = vshrl.u32 %v386, 7
    %v388 = vsub.s32 0, %v387
    %v389 = vrot.slane %v384, %v388
    %v423 = vunpack.c.l.b16 %v352
    %v424 = vunpack.c.l.b16 %v353
    %v425 = vunpack.c.l.b16 %v354
    %v426 = vunpack.c.l.b16 %v355
    %v427 = vunpack.c.l.b16 %v356
    %v428 = vunpack.c.l.b16 %v357
    %v429 = vunpack.c.l.b16 %v358
    %v430 = vunpack.c.l.b16 %v359
    %v431 = vunpack.c.l.b16 %v360
    %v432 = vunpack.c.l.b16 %v361
    %v433 = vunpack.c.l.b16 %v362
    %v434 = vunpack.c.l.b16 %v363
    %v435 = vunpack.c.l.b16 %v364
    %v436 = vunpack.c.l.b16 %v365
    %v437 = vunpack.c.l.b16 %v366
    %v438 = vunpack.c.l.b16 %v367
    %v439 = vunpack.c.l.b16 %v368
    %v440 = vunpack.c.l.b16 %v369
    %v441 = vunpack.c.l.b16 %v370
    %v442 = vunpack.c.l.b16 %v371
    %v443 = vunpack.c.l.b16 %v372
    %v444 = vunpack.c.l.b16 %v373
    %v445 = vunpack.c.l.b16 %v374
    %v446 = vunpack.c.l.b16 %v375
    %v447 = vunpack.c.l.b16 %v376
    %v448 = vunpack.c.l.b16 %v377
    %v449 = vunpack.c.l.b16 %v378
    %v450 = vunpack.c.l.b16 %v379
    %v451 = vunpack.c.l.b16 %v380
    %v452 = vunpack.c.l.b16 %v381
    %v453 = vunpack.c.l.b16 %v382
    %v454 = vunpack.c.l.b16 %v383
    %v455 = vpack.c.b16 %v424, %v423
    %v456 = vpack.c.b16 %v426, %v425
    %v457 = vpack.c.b16 %v428, %v427
    %v458 = vpack.c.b16 %v430, %v429
    %v459 = vpack.c.b16 %v432, %v431
    %v460 = vpack.c.b16 %v434, %v433
    %v461 = vpack.c.b16 %v436, %v435
    %v462 = vpack.c.b16 %v438, %v437
    %v463 = vpack.c.b16 %v440, %v439
    %v464 = vpack.c.b16 %v442, %v441
    %v465 = vpack.c.b16 %v444, %v443
    %v466 = vpack.c.b16 %v446, %v445
    %v467 = vpack.c.b16 %v448, %v447
    %v468 = vpack.c.b16 %v450, %v449
    %v469 = vpack.c.b16 %v452, %v451
    %v470 = vpack.c.b16 %v454, %v453
    %487 = vmatprep.subr.bf16.mxu0 0
    %488 = vmatpush1.bf16.msra.mxu0 %v455
    %489 = vmatprep.subr.bf16.mxu0 0
    %490 = vmatpush1.bf16.msra.mxu0 %v456
    %491 = vmatprep.subr.bf16.mxu0 0
    %492 = vmatpush1.bf16.msra.mxu0 %v457
    %493 = vmatprep.subr.bf16.mxu0 0
    %494 = vmatpush1.bf16.msra.mxu0 %v458
    %495 = vmatprep.subr.bf16.mxu0 0
    %496 = vmatpush1.bf16.msra.mxu0 %v459
    %497 = vmatprep.subr.bf16.mxu0 0
    %498 = vmatpush1.bf16.msra.mxu0 %v460
    %499 = vmatprep.subr.bf16.mxu0 0
    %500 = vmatpush1.bf16.msra.mxu0 %v461
    %501 = vmatprep.subr.bf16.mxu0 0
    %502 = vmatpush1.bf16.msra.mxu0 %v462
    %503 = vmatprep.subr.bf16.mxu0 0
    %504 = vmatpush1.bf16.msra.mxu0 %v463
    %505 = vmatprep.subr.bf16.mxu0 0
    %506 = vmatpush1.bf16.msra.mxu0 %v464
    %507 = vmatprep.subr.bf16.mxu0 0
    %508 = vmatpush1.bf16.msra.mxu0 %v465
    %509 = vmatprep.subr.bf16.mxu0 0
    %510 = vmatpush1.bf16.msra.mxu0 %v466
    %511 = vmatprep.subr.bf16.mxu0 0
    %512 = vmatpush1.bf16.msra.mxu0 %v467
    %513 = vmatprep.subr.bf16.mxu0 0
    %514 = vmatpush1.bf16.msra.mxu0 %v468
    %515 = vmatprep.subr.bf16.mxu0 0
    %516 = vmatpush1.bf16.msra.mxu0 %v469
    %517 = vmatprep.subr.bf16.mxu0 0
    %518 = vmatpush1.bf16.msra.mxu0 %v470
    %519 = vmatprep.mubr.bf16.mxu0 %v351
    %520 = vmatmul.mubr.bf16.gmra.mrb[0].mxu0 %v350
    %v521 = vpop.f32.mrb[0].mxu0
    %v522 = vadd.f32 %v389, %v521
    %v523 = vpop.f32.mrb[0].mxu0
    %v524 = vpop.f32.mrb[0].mxu0
    %v525 = vadd.f32 %v389, %v524
    %v526 = vpop.f32.mrb[0].mxu0
    %527 = vdwg.mxu0
    %v528 = vmax.f32 %v522, 0.0
    %v529 = vmax.f32 %v525, 0.0
    %v530 = vpack.c.bf16 %v529, %v528
    %v531 = vld [vmem:[#allocation10] sm:$0xf]
    %v532 = vld [vmem:[#allocation10 + $0x4] sm:$0xf]
    %v533 = vld [vmem:[#allocation10 + $0x8] sm:$0xf]
    %v534 = vld [vmem:[#allocation10 + $0xc] sm:$0xf]
    %v535 = vld [vmem:[#allocation10 + $0x10] sm:$0xf]
    %v536 = vld [vmem:[#allocation10 + $0x14] sm:$0xf]
    %v537 = vld [vmem:[#allocation10 + $0x18] sm:$0xf]
    %v538 = vld [vmem:[#allocation10 + $0x1c] sm:$0xf]
    %v539 = vld [vmem:[#allocation10 + $0x20] sm:$0xf]
    %v540 = vld [vmem:[#allocation10 + $0x24] sm:$0xf]
    %v541 = vld [vmem:[#allocation10 + $0x28] sm:$0xf]
    %v542 = vld [vmem:[#allocation10 + $0x2c] sm:$0xf]
    %v543 = vld [vmem:[#allocation10 + $0x30] sm:$0xf]
    %v544 = vld [vmem:[#allocation10 + $0x34] sm:$0xf]
    %v545 = vld [vmem:[#allocation10 + $0x38] sm:$0xf]
    %v546 = vld [vmem:[#allocation10 + $0x3c] sm:$0xf]
    %v547 = vld [vmem:[%s8] sm:$0x1]
    %v549 = vlaneseq
    %v550 = vshrl.u32 %v549, 7
    %v551 = vsub.s32 0, %v550
    %v552 = vrot.slane %v547, %v551
    %v570 = vunpack.c.l.b16 %v531
    %v571 = vunpack.c.l.b16 %v532
    %v572 = vunpack.c.l.b16 %v533
    %v573 = vunpack.c.l.b16 %v534
    %v574 = vunpack.c.l.b16 %v535
    %v575 = vunpack.c.l.b16 %v536
    %v576 = vunpack.c.l.b16 %v537
    %v577 = vunpack.c.l.b16 %v538
    %v578 = vunpack.c.l.b16 %v539
    %v579 = vunpack.c.l.b16 %v540
    %v580 = vunpack.c.l.b16 %v541
    %v581 = vunpack.c.l.b16 %v542
    %v582 = vunpack.c.l.b16 %v543
    %v583 = vunpack.c.l.b16 %v544
    %v584 = vunpack.c.l.b16 %v545
    %v585 = vunpack.c.l.b16 %v546
    %v586 = vpack.c.b16 %v571, %v570
    %v587 = vpack.c.b16 %v573, %v572
    %v588 = vpack.c.b16 %v575, %v574
    %v589 = vpack.c.b16 %v577, %v576
    %v590 = vpack.c.b16 %v579, %v578
    %v591 = vpack.c.b16 %v581, %v580
    %v592 = vpack.c.b16 %v583, %v582
    %v593 = vpack.c.b16 %v585, %v584
    %602 = vmatprep.subr.bf16.mxu0 0
    %603 = vmatpush1.bf16.msra.mxu0 %v586
    %604 = vmatprep.subr.bf16.mxu0 0
    %605 = vmatpush1.bf16.msra.mxu0 %v587
    %606 = vmatprep.subr.bf16.mxu0 0
    %607 = vmatpush1.bf16.msra.mxu0 %v588
    %608 = vmatprep.subr.bf16.mxu0 0
    %609 = vmatpush1.bf16.msra.mxu0 %v589
    %610 = vmatprep.subr.bf16.mxu0 0
    %611 = vmatpush1.bf16.msra.mxu0 %v590
    %612 = vmatprep.subr.bf16.mxu0 0
    %613 = vmatpush1.bf16.msra.mxu0 %v591
    %614 = vmatprep.subr.bf16.mxu0 0
    %615 = vmatpush1.bf16.msra.mxu0 %v592
    %616 = vmatprep.subr.bf16.mxu0 0
    %617 = vmatpush1.bf16.msra.mxu0 %v593
    %618 = vmatprep.subr.bf16.mxu0 0
    %619 = vmatpush1.bf16.msra.mxu0 0
    %620 = vmatprep.subr.bf16.mxu0 0
    %621 = vmatpush1.bf16.msra.mxu0 0
    %622 = vmatprep.subr.bf16.mxu0 0
    %623 = vmatpush1.bf16.msra.mxu0 0
    %624 = vmatprep.subr.bf16.mxu0 0
    %625 = vmatpush1.bf16.msra.mxu0 0
    %626 = vmatprep.subr.bf16.mxu0 0
    %627 = vmatpush1.bf16.msra.mxu0 0
    %628 = vmatprep.subr.bf16.mxu0 0
    %629 = vmatpush1.bf16.msra.mxu0 0
    %630 = vmatprep.subr.bf16.mxu0 0
    %631 = vmatpush1.bf16.msra.mxu0 0
    %632 = vmatprep.subr.bf16.mxu0 0
    %633 = vmatpush1.bf16.msra.mxu0 0
    %634 = vmatprep.mubr.bf16.mxu0 0
    %635 = vmatmul.mubr.bf16.gmra.mrb[0].mxu0 %v530
    %v636 = vpop.f32.mrb[0].mxu0
    %v637 = vadd.f32 %v552, %v636
    %v638 = vpop.f32.mrb[0].mxu0
    %v639 = vpop.f32.mrb[0].mxu0
    %v640 = vadd.f32 %v552, %v639
    %v641 = vpop.f32.mrb[0].mxu0
    %642 = vdwg.mxu0
    %v643 = vmax.f32 %v637, 0.0
    %v644 = vmax.f32 %v640, 0.0
    %v645 = vld [vmem:[%s9] sm:$0x1]
    %v647 = vlaneseq
    %v648 = vshrl.u32 %v647, 7
    %v649 = vsub.s32 0, %v648
    %v650 = vrot.slane %v645, %v649
    %v652 = vmul.f32 %v643, %v650
    %v653 = vmul.f32 %v644, %v650
    %654 = vadd.xlane.f32.xlu0 %v652
    %v655 = vpop.xlane.xlu0 %654
    %656 = vadd.xlane.f32.xlu0 %v653
    %v657 = vpop.xlane.xlu0 %656
    %v658 = vld [vmem:[#allocation2] sm:$0x1]
    %v660 = vlaneseq
    %v661 = vshrl.u32 %v660, 7
    %v662 = vsub.s32 0, %v661
    %v663 = vrot.slane %v658, %v662
    %v665 = vadd.f32 %v655, %v663
    %v666 = vadd.f32 %v657, %v663
    %v667 = vsub.f32 0.0, %v665
    %v668 = vsub.f32 0.0, %v666
    %v669 = vmul.f32 %v667, 1.442695
    %v670 = vpow.pop %v669
    %v671 = vmul.f32 %v668, 1.442695
    %v672 = vpow.pop %v671
    %v673 = vadd.f32 %v670, 1.0
    %v674 = vadd.f32 %v672, 1.0
    %v675 = vrcp.pop %v673
    %v676 = vrcp.pop %v674
    %vm677 = vcmask 7168
    %678 = vst.msk [vmem:[%s11] sm:$0xff] %vm677, %v675
    %679 = vst.msk [vmem:[%s11 + $0x8] sm:$0xff] %vm677, %v676
    // Predicated region
    $region66: #{tpu_custom_call.1} parent=1 // pred_check
      _
    $region67: #{tpu_custom_call.1} parent=1 // pred_check_branch
      %681 = sbr.rel (0) target = $region69
    $region68: #{tpu_custom_call.1} parent=1 // pred_region
      _
    $region69: #{tpu_custom_call.1} parent=1 // pred_fallthru
      _
    // Predicated region
    $region70: #{tpu_custom_call.1} parent=1 // pred_check
      _
    $region71: #{tpu_custom_call.1} parent=1 // pred_check_branch
      %683 = sbr.rel (0) target = $region73
    $region72: #{tpu_custom_call.1} parent=1 // pred_region
      _
    $region73: #{tpu_custom_call.1} parent=1 // pred_fallthru
      _
    %684 = vsyncpa [#allocation4], 1
    %685 = vsyncpa [#allocation6], 1
    %686 = vsyncpa [#allocation9], 1

</llo_original>
